<compile_context>
chip_gen: v7x
topology: tpu7x:2x2x1
jax: 0.10.0
libtpu: 0.0.40
codegen_flags: <defaults>
</compile_context>

<pallas_src>
import functools

import jax
import jax.numpy as jnp
from jax.experimental import pallas as pl
from jax.experimental.pallas import tpu as pltpu


def _round_up(n: int, m: int) -> int:
    return ((n + m - 1) // m) * m


def _make_fused_mlp_kernel(n_layers, logical_out_dims, apply_acts,
                           layer_norm_on, matmul_dtype,
                           neg_slope=0.01, eps=1e-5):
    """Fused kernel: chain (matmul + bias [+ leaky_relu] [+ layernorm]) x n_layers.

    Ref layout: (x_ref, w_0, aux_0, w_1, aux_1, ..., o_ref)
      w_l   : (K_pad, N_pad) in `matmul_dtype`, zero-padded
      aux_l : (8, N_pad) f32; row 0 = bias, row 1 = gamma, row 2 = beta
              (all zero in padded lanes so padded activations stay 0)
    """

    def kernel(*refs):
        x_ref = refs[0]
        o_ref = refs[-1]
        h = x_ref[...]                                    # (tm, K0_pad) f32
        for l in range(n_layers):
            w = refs[1 + 2 * l][...]                      # (K_pad, N_pad)
            aux = refs[2 + 2 * l][...]                    # (8, N_pad) f32
            b = aux[0:1, :]
            # MXU: bf16 x bf16 -> f32 accumulate.
            y = jnp.dot(h.astype(matmul_dtype), w,
                        preferred_element_type=jnp.float32)
            y = y + b
            if apply_acts[l]:
                y = jnp.where(y > 0, y, neg_slope * y)    # leaky_relu
            if layer_norm_on:
                # Padded lanes of y are exactly 0, so plain sums over the
                # padded row equal sums over the logical N; divide by the
                # logical N.  Single-pass var = E[y^2] - mu^2 saves one
                # XLU reduction pass.
                inv_n = 1.0 / float(logical_out_dims[l])
                mu = jnp.sum(y, axis=-1, keepdims=True) * inv_n
                var = jnp.sum(y * y, axis=-1, keepdims=True) * inv_n - mu * mu
                var = jnp.maximum(var, 0.0)
                gamma = aux[1:2, :]
                beta = aux[2:3, :]
                # gamma/beta are 0 in padded lanes -> padded lanes stay 0.
                y = (y - mu) * jax.lax.rsqrt(var + eps) * gamma + beta
            h = y
        o_ref[...] = h.astype(o_ref.dtype)

    return kernel


@functools.partial(
    jax.jit,
    static_argnames=("logical_dims", "final_layer_act", "layer_norm_on",
                     "matmul_dtype"))
def mlp_forward(x, weights_padded, auxes_padded, *, logical_dims,
                final_layer_act, layer_norm_on, matmul_dtype):
    """Single fused Pallas forward pass for the whole MLP."""
    n_layers = len(logical_dims) - 1
    M, K0 = x.shape
    assert K0 == logical_dims[0]

    k0_pad = weights_padded[0].shape[0]
    n_out = logical_dims[-1]
    n_out_pad = weights_padded[-1].shape[1]

    # Batch (sublane) blocking: pad to a multiple of 8; block by <=256 rows.
    m8 = _round_up(M, 8)
    if m8 <= 256:
        tm, m_pad = m8, m8
    else:
        tm = 256
        m_pad = _round_up(M, 256)

    x_pad = jnp.pad(x.astype(jnp.float32),
                    ((0, m_pad - M), (0, k0_pad - K0)))

    apply_acts = tuple((l < n_layers - 1) or final_layer_act
                       for l in range(n_layers))
    kernel = _make_fused_mlp_kernel(
        n_layers, logical_dims[1:], apply_acts, layer_norm_on, matmul_dtype)

    in_specs = [pl.BlockSpec((tm, k0_pad), lambda i: (i, 0))]
    operands = [x_pad]
    for l in range(n_layers):
        w = weights_padded[l]
        aux = auxes_padded[l]
        in_specs.append(pl.BlockSpec(w.shape, lambda i: (0, 0)))
        in_specs.append(pl.BlockSpec(aux.shape, lambda i: (0, 0)))
        operands += [w, aux]

    out = pl.pallas_call(
        kernel,
        out_shape=jax.ShapeDtypeStruct((m_pad, n_out_pad), jnp.float32),
        grid=(m_pad // tm,),
        in_specs=in_specs,
        out_specs=pl.BlockSpec((tm, n_out_pad), lambda i: (i, 0)),
        compiler_params=pltpu.CompilerParams(
            dimension_semantics=("parallel",)),
    )(*operands)

    return out[:M, :n_out]


class Transformation:
    """JAX/Pallas port of the PyTorch `Transformation` MLP."""

    def __init__(self, in_feats, n_hids, out_feats, key,
                 layer_norm_on=False, final_layer_act=True,
                 matmul_dtype=jnp.bfloat16):
        self.in_feats = in_feats
        self.n_hids = list(n_hids)
        self.out_feats = out_feats
        self.layer_norm_on = layer_norm_on
        self.final_layer_act = final_layer_act
        self.matmul_dtype = matmul_dtype

        dims = [in_feats] + self.n_hids + [out_feats]
        self.logical_dims = tuple(dims)
        self.n_layers = len(dims) - 1

        # Logical (unpadded, f32) parameters -- Xavier-uniform weights,
        # zero biases, unit gamma / zero beta (matches the PyTorch reset()).
        self.weights, self.biases, self.gammas, self.betas = [], [], [], []
        for l in range(self.n_layers):
            key, sub = jax.random.split(key)
            fan_in, fan_out = dims[l], dims[l + 1]
            init_range = float((6.0 / (fan_in + fan_out)) ** 0.5)
            w = jax.random.uniform(sub, (fan_in, fan_out), jnp.float32,
                                   minval=-init_range, maxval=init_range)
            self.weights.append(w)
            self.biases.append(jnp.zeros((fan_out,), jnp.float32))
            self.gammas.append(jnp.ones((fan_out,), jnp.float32))
            self.betas.append(jnp.zeros((fan_out,), jnp.float32))

        self._rebuild_padded()

    def _rebuild_padded(self):
        """Build lane-padded (mult-of-128) kernel operands from the logical params."""
        self.weights_padded, self.auxes_padded = [], []
        for l in range(self.n_layers):
            fan_in = self.logical_dims[l]
            fan_out = self.logical_dims[l + 1]
            k_pad = _round_up(fan_in, 128)
            n_pad = _round_up(fan_out, 128)
            w_p = jnp.zeros((k_pad, n_pad), jnp.float32)
            w_p = w_p.at[:fan_in, :fan_out].set(self.weights[l])
            self.weights_padded.append(w_p.astype(self.matmul_dtype))
            # Bias / gamma / beta fused into one (8, N_pad) operand
            # (one DMA instead of three tiny ones).
            aux = jnp.zeros((8, n_pad), jnp.float32)
            aux = aux.at[0, :fan_out].set(self.biases[l])
            aux = aux.at[1, :fan_out].set(self.gammas[l])
            aux = aux.at[2, :fan_out].set(self.betas[l])
            self.auxes_padded.append(aux)

    def __call__(self, x):
        return mlp_forward(
            x, tuple(self.weights_padded), tuple(self.auxes_padded),
            logical_dims=self.logical_dims,
            final_layer_act=self.final_layer_act,
            layer_norm_on=self.layer_norm_on,
            matmul_dtype=self.matmul_dtype)


def _reference_forward(model, x, *, matmul_dtype=jnp.float32,
                       neg_slope=0.01, eps=1e-5):
    """Pure-JAX reference (optionally with the same bf16 matmul inputs)."""
    n = len(model.weights)
    h = x
    for l in range(n):
        y = jnp.dot(h.astype(matmul_dtype),
                    model.weights[l].astype(matmul_dtype),
                    preferred_element_type=jnp.float32)
        y = y + model.biases[l]
        if l < n - 1 or model.final_layer_act:
            y = jnp.where(y > 0, y, neg_slope * y)
        if model.layer_norm_on:
            mu = jnp.mean(y, axis=-1, keepdims=True)
            var = jnp.mean((y - mu) ** 2, axis=-1, keepdims=True)
            y = (y - mu) * jax.lax.rsqrt(var + eps) * model.gammas[l] \
                + model.betas[l]
        h = y
    return h


if __name__ == "__main__":
    key = jax.random.PRNGKey(0)
    k1, k2, kx, kb = jax.random.split(key, 4)

    batch, in_feats, n_hids, out_feats = 8, 32, [64, 48], 16
    x = jax.random.normal(kx, (batch, in_feats), jnp.float32)

    # ---- Model A: no LayerNorm, final activation on, non-zero biases ----
    model_a = Transformation(in_feats, n_hids, out_feats, k1,
                             layer_norm_on=False, final_layer_act=True)
    model_a.biases = [
        0.1 * jax.random.normal(jax.random.fold_in(kb, i), b.shape, jnp.float32)
        for i, b in enumerate(model_a.biases)]
    model_a._rebuild_padded()

    out_a = jax.block_until_ready(model_a(x))
    assert out_a.shape == (batch, out_feats)
    ref_a = _reference_forward(model_a, x, matmul_dtype=jnp.bfloat16)
    assert jnp.allclose(out_a, ref_a, atol=1e-4, rtol=1e-3), \
        float(jnp.max(jnp.abs(out_a - ref_a)))
    ref_a32 = _reference_forward(model_a, x)          # loose f32 sanity check
    assert jnp.allclose(out_a, ref_a32, atol=1e-1, rtol=1e-1)

    # ---- Model B: LayerNorm on, no final activation, non-trivial gamma/beta
    model_b = Transformation(in_feats, n_hids, out_feats, k2,
                             layer_norm_on=True, final_layer_act=False)
    model_b.gammas = [
        1.0 + 0.1 * jax.random.normal(jax.random.fold_in(kb, 100 + i),
                                      g.shape, jnp.float32)
        for i, g in enumerate(model_b.gammas)]
    model_b.betas = [
        0.1 * jax.random.normal(jax.random.fold_in(kb, 200 + i),
                                b.shape, jnp.float32)
        for i, b in enumerate(model_b.betas)]
    model_b._rebuild_padded()

    out_b = jax.block_until_ready(model_b(x))
    assert out_b.shape == (batch, out_feats)
    ref_b = _reference_forward(model_b, x, matmul_dtype=jnp.bfloat16)
    assert jnp.allclose(out_b, ref_b, atol=2e-3, rtol=2e-3), \
        float(jnp.max(jnp.abs(out_b - ref_b)))

    print("KERNEL_OK")
</pallas_src>

<mosaic_0001>
module attributes {stable_mosaic.version = 11 : i64} {
  func.func @kernel(%arg0: i32, %arg1: memref<8x128xf32, #tpu.memory_space<vmem>>, %arg2: memref<128x128xbf16, #tpu.memory_space<vmem>>, %arg3: memref<8x128xf32, #tpu.memory_space<vmem>>, %arg4: memref<128x128xbf16, #tpu.memory_space<vmem>>, %arg5: memref<8x128xf32, #tpu.memory_space<vmem>>, %arg6: memref<128x128xbf16, #tpu.memory_space<vmem>>, %arg7: memref<8x128xf32, #tpu.memory_space<vmem>>, %arg8: memref<8x128xf32, #tpu.memory_space<vmem>>) attributes {dimension_semantics = [#tpu.dimension_semantics<parallel>], iteration_bounds = array<i64: 1>, scalar_prefetch = 0 : i64, scratch_operands = 0 : i64, tpu.core_type = #tpu.core_type<tc>, window_params = [{transform_indices = @transform_0, window_bounds = array<i64: 8, 128>}, {pipeline_mode = #tpu.pipeline_mode<synchronous>, transform_indices = @transform_1, window_bounds = array<i64: 128, 128>}, {pipeline_mode = #tpu.pipeline_mode<synchronous>, transform_indices = @transform_2, window_bounds = array<i64: 8, 128>}, {pipeline_mode = #tpu.pipeline_mode<synchronous>, transform_indices = @transform_3, window_bounds = array<i64: 128, 128>}, {pipeline_mode = #tpu.pipeline_mode<synchronous>, transform_indices = @transform_4, window_bounds = array<i64: 8, 128>}, {pipeline_mode = #tpu.pipeline_mode<synchronous>, transform_indices = @transform_5, window_bounds = array<i64: 128, 128>}, {pipeline_mode = #tpu.pipeline_mode<synchronous>, transform_indices = @transform_6, window_bounds = array<i64: 8, 128>}, {transform_indices = @transform_7, window_bounds = array<i64: 8, 128>}]} {
    %c0 = arith.constant 0 : index
    %c0_0 = arith.constant 0 : index
    %0 = vector.load %arg1[%c0, %c0_0] : memref<8x128xf32, #tpu.memory_space<vmem>>, vector<8x128xf32>
    %c0_1 = arith.constant 0 : index
    %c0_2 = arith.constant 0 : index
    %1 = vector.load %arg2[%c0_1, %c0_2] : memref<128x128xbf16, #tpu.memory_space<vmem>>, vector<128x128xbf16>
    %c0_3 = arith.constant 0 : index
    %c0_4 = arith.constant 0 : index
    %2 = vector.load %arg3[%c0_3, %c0_4] : memref<8x128xf32, #tpu.memory_space<vmem>>, vector<8x128xf32>
    %3 = vector.extract_strided_slice %2 {offsets = [0, 0], sizes = [1, 128], strides = [1, 1]} : vector<8x128xf32> to vector<1x128xf32>
    %4 = arith.truncf %0 : vector<8x128xf32> to vector<8x128xbf16>
    %cst = arith.constant dense<0.000000e+00> : vector<8x128xf32>
    %5 = tpu.matmul %4, %1, %cst {dimension_numbers = #tpu.dot_dimension_numbers<[1], [0], [0], [1], [0, 0, 1, 1], [], []>} : vector<8x128xbf16>, vector<128x128xbf16>, vector<8x128xf32> -> vector<8x128xf32>
    %6 = vector.broadcast %3 : vector<1x128xf32> to vector<8x128xf32>
    %7 = arith.addf %5, %6 : vector<8x128xf32>
    %cst_5 = arith.constant 0.000000e+00 : f32
    %8 = vector.broadcast %cst_5 : f32 to vector<8x128xf32>
    %9 = arith.cmpf ogt, %7, %8 : vector<8x128xf32>
    %cst_6 = arith.constant 0.00999999977 : f32
    %10 = vector.broadcast %cst_6 : f32 to vector<8x128xf32>
    %11 = arith.mulf %10, %7 : vector<8x128xf32>
    %12 = arith.select %9, %7, %11 : vector<8x128xi1>, vector<8x128xf32>
    %c0_7 = arith.constant 0 : index
    %c0_8 = arith.constant 0 : index
    %13 = vector.load %arg4[%c0_7, %c0_8] : memref<128x128xbf16, #tpu.memory_space<vmem>>, vector<128x128xbf16>
    %c0_9 = arith.constant 0 : index
    %c0_10 = arith.constant 0 : index
    %14 = vector.load %arg5[%c0_9, %c0_10] : memref<8x128xf32, #tpu.memory_space<vmem>>, vector<8x128xf32>
    %15 = vector.extract_strided_slice %14 {offsets = [0, 0], sizes = [1, 128], strides = [1, 1]} : vector<8x128xf32> to vector<1x128xf32>
    %16 = arith.truncf %12 : vector<8x128xf32> to vector<8x128xbf16>
    %cst_11 = arith.constant dense<0.000000e+00> : vector<8x128xf32>
    %17 = tpu.matmul %16, %13, %cst_11 {dimension_numbers = #tpu.dot_dimension_numbers<[1], [0], [0], [1], [0, 0, 1, 1], [], []>} : vector<8x128xbf16>, vector<128x128xbf16>, vector<8x128xf32> -> vector<8x128xf32>
    %18 = vector.broadcast %15 : vector<1x128xf32> to vector<8x128xf32>
    %19 = arith.addf %17, %18 : vector<8x128xf32>
    %cst_12 = arith.constant 0.000000e+00 : f32
    %20 = vector.broadcast %cst_12 : f32 to vector<8x128xf32>
    %21 = arith.cmpf ogt, %19, %20 : vector<8x128xf32>
    %cst_13 = arith.constant 0.00999999977 : f32
    %22 = vector.broadcast %cst_13 : f32 to vector<8x128xf32>
    %23 = arith.mulf %22, %19 : vector<8x128xf32>
    %24 = arith.select %21, %19, %23 : vector<8x128xi1>, vector<8x128xf32>
    %c0_14 = arith.constant 0 : index
    %c0_15 = arith.constant 0 : index
    %25 = vector.load %arg6[%c0_14, %c0_15] : memref<128x128xbf16, #tpu.memory_space<vmem>>, vector<128x128xbf16>
    %c0_16 = arith.constant 0 : index
    %c0_17 = arith.constant 0 : index
    %26 = vector.load %arg7[%c0_16, %c0_17] : memref<8x128xf32, #tpu.memory_space<vmem>>, vector<8x128xf32>
    %27 = vector.extract_strided_slice %26 {offsets = [0, 0], sizes = [1, 128], strides = [1, 1]} : vector<8x128xf32> to vector<1x128xf32>
    %28 = arith.truncf %24 : vector<8x128xf32> to vector<8x128xbf16>
    %cst_18 = arith.constant dense<0.000000e+00> : vector<8x128xf32>
    %29 = tpu.matmul %28, %25, %cst_18 {dimension_numbers = #tpu.dot_dimension_numbers<[1], [0], [0], [1], [0, 0, 1, 1], [], []>} : vector<8x128xbf16>, vector<128x128xbf16>, vector<8x128xf32> -> vector<8x128xf32>
    %30 = vector.broadcast %27 : vector<1x128xf32> to vector<8x128xf32>
    %31 = arith.addf %29, %30 : vector<8x128xf32>
    %cst_19 = arith.constant 0.000000e+00 : f32
    %32 = vector.broadcast %cst_19 : f32 to vector<8x128xf32>
    %33 = arith.cmpf ogt, %31, %32 : vector<8x128xf32>
    %cst_20 = arith.constant 0.00999999977 : f32
    %34 = vector.broadcast %cst_20 : f32 to vector<8x128xf32>
    %35 = arith.mulf %34, %31 : vector<8x128xf32>
    %36 = arith.select %33, %31, %35 : vector<8x128xi1>, vector<8x128xf32>
    %c0_21 = arith.constant 0 : index
    %c0_22 = arith.constant 0 : index
    %37 = vector.load %arg8[%c0_21, %c0_22] : memref<8x128xf32, #tpu.memory_space<vmem>>, vector<8x128xf32>
    tpu.vector_store %arg8[%c0_21, %c0_22], %36 {strides = array<i32>} : memref<8x128xf32, #tpu.memory_space<vmem>>, vector<8x128xf32>,
    return
  }
  func.func @transform_0(%arg0: i32) -> (i32, i32) {
    %c0_i32 = arith.constant 0 : i32
    %c0_i32_0 = arith.constant 0 : i32
    return %arg0, %c0_i32 : i32, i32
  }
  func.func @transform_1(%arg0: i32) -> (i32, i32) {
    %c0_i32 = arith.constant 0 : i32
    %c0_i32_0 = arith.constant 0 : i32
    %c0_i32_1 = arith.constant 0 : i32
    return %c0_i32, %c0_i32_0 : i32, i32
  }
  func.func @transform_2(%arg0: i32) -> (i32, i32) {
    %c0_i32 = arith.constant 0 : i32
    %c0_i32_0 = arith.constant 0 : i32
    %c0_i32_1 = arith.constant 0 : i32
    return %c0_i32, %c0_i32_0 : i32, i32
  }
  func.func @transform_3(%arg0: i32) -> (i32, i32) {
    %c0_i32 = arith.constant 0 : i32
    %c0_i32_0 = arith.constant 0 : i32
    %c0_i32_1 = arith.constant 0 : i32
    return %c0_i32, %c0_i32_0 : i32, i32
  }
  func.func @transform_4(%arg0: i32) -> (i32, i32) {
    %c0_i32 = arith.constant 0 : i32
    %c0_i32_0 = arith.constant 0 : i32
    %c0_i32_1 = arith.constant 0 : i32
    return %c0_i32, %c0_i32_0 : i32, i32
  }
  func.func @transform_5(%arg0: i32) -> (i32, i32) {
    %c0_i32 = arith.constant 0 : i32
    %c0_i32_0 = arith.constant 0 : i32
    %c0_i32_1 = arith.constant 0 : i32
    return %c0_i32, %c0_i32_0 : i32, i32
  }
  func.func @transform_6(%arg0: i32) -> (i32, i32) {
    %c0_i32 = arith.constant 0 : i32
    %c0_i32_0 = arith.constant 0 : i32
    %c0_i32_1 = arith.constant 0 : i32
    return %c0_i32, %c0_i32_0 : i32, i32
  }
  func.func @transform_7(%arg0: i32) -> (i32, i32) {
    %c0_i32 = arith.constant 0 : i32
    %c0_i32_0 = arith.constant 0 : i32
    return %arg0, %c0_i32 : i32, i32
  }
}

</mosaic_0001>

<llo_original>
// kernel: mlp_forward.1
$region0: #{mlp_forward.1}
  #allocation0 [shape = 'u32[]', space=smem, size = 0x4, offset = 0x4, fixed_abs, tag = 'smem constant byte address 0x4 - core index']
  #allocation1 [shape = 'u32[144,128]{1,0:T(1,128)}', space=vmem, size = 0x12000, scoped, tag = 'internal scratch']
  %s0 = inlined_call_operand.vmem [shape: f32[8,128], index: 0, kind: input, shape index: {}]
  %s1 = inlined_call_operand.hbm [shape: bf16[128,128], index: 1, kind: input, shape index: {}]
  %s2 = inlined_call_operand.vmem [shape: f32[8,128], index: 2, kind: input, shape index: {}]
  %s3 = inlined_call_operand.hbm [shape: bf16[128,128], index: 3, kind: input, shape index: {}]
  %s4 = inlined_call_operand.vmem [shape: f32[8,128], index: 4, kind: input, shape index: {}]
  %s5 = inlined_call_operand.hbm [shape: bf16[128,128], index: 5, kind: input, shape index: {}]
  %s6 = inlined_call_operand.vmem [shape: f32[8,128], index: 6, kind: input, shape index: {}]
  %s7 = inlined_call_operand.hbm [shape: f32[8,128], index: 7, kind: output, shape index: {}]
  %s8 = sld [smem:[#allocation0]]
  $region50: #{mlp_forward.1} parent=0
    _
  %s10 = ssub.s32 1, %s8
  %s11 = scalar_select 0, %s10, %s8
  $region1: #{mlp_forward.1} parent=0
    #allocation2 [shape = 'u8[32768]{0}', space=vmem, size = 0x8000, scoped, tag = 'input window, operand 1, single buffered']
    #allocation3 [shape = 's32[1]{0}', space=sflag, size = 0x4, scoped, tag = 'scoped memory for mlp_forward.1']
    #allocation4 [shape = 's32[1]{0}', space=sflag, size = 0x4, scoped, tag = 'scoped memory for mlp_forward.1']
    #allocation5 [shape = 'u8[32768]{0}', space=vmem, size = 0x8000, scoped, tag = 'input window, operand 3, single buffered']
    #allocation6 [shape = 's32[1]{0}', space=sflag, size = 0x4, scoped, tag = 'scoped memory for mlp_forward.1']
    #allocation7 [shape = 'u8[32768]{0}', space=vmem, size = 0x8000, scoped, tag = 'input window, operand 5, single buffered']
    #allocation8 [shape = 'u8[4096]{0}', space=vmem, size = 0x1000, scoped, tag = 'output window, operand 0, single buffered']
    %12 = vsyncpa [#allocation3], 0
    %13 = vsyncpa [#allocation6], 0
    %14 = vsyncpa [#allocation4], 0
    // Predicated region
    $region2: #{mlp_forward.1} parent=1 // pred_check
      _
    $region3: #{mlp_forward.1} parent=1 // pred_check_branch
      %16 = sbr.rel (0) target = $region5
    $region4: #{mlp_forward.1} parent=1 // pred_region
      _
    $region5: #{mlp_forward.1} parent=1 // pred_fallthru
      _
    // Predicated region
    $region6: #{mlp_forward.1} parent=1 // pred_check
      _
    $region7: #{mlp_forward.1} parent=1 // pred_check_branch
      %18 = sbr.rel (0) target = $region9
    $region8: #{mlp_forward.1} parent=1 // pred_region
      %s20 = ssub.s32 1024, 1024
      %21 = vsyncadd [#allocation3], %s20
      %s22 = sshll.u32 [#allocation2], 4
      %s23 = int_to_ptr.vmem [resolvable:$true] %s22
      %28 = dma.hbm_to_vmem [thread:$0]  %s1, 1024, %s23, [#allocation3], 64, 64, 4
    $region9: #{mlp_forward.1} parent=1 // pred_fallthru
      _
    // Predicated region
    $region10: #{mlp_forward.1} parent=1 // pred_check
      _
    $region11: #{mlp_forward.1} parent=1 // pred_check_branch
      %30 = sbr.rel (0) target = $region13
    $region12: #{mlp_forward.1} parent=1 // pred_region
      _
    $region13: #{mlp_forward.1} parent=1 // pred_fallthru
      _
    // Predicated region
    $region14: #{mlp_forward.1} parent=1 // pred_check
      _
    $region15: #{mlp_forward.1} parent=1 // pred_check_branch
      %32 = sbr.rel (0) target = $region17
    $region16: #{mlp_forward.1} parent=1 // pred_region
      %s34 = ssub.s32 1024, 1024
      %35 = vsyncadd [#allocation6], %s34
      %s36 = sshll.u32 [#allocation5], 4
      %s37 = int_to_ptr.vmem [resolvable:$true] %s36
      %42 = dma.hbm_to_vmem [thread:$0]  %s3, 1024, %s37, [#allocation6], 64, 64, 4
    $region17: #{mlp_forward.1} parent=1 // pred_fallthru
      _
    // Predicated region
    $region18: #{mlp_forward.1} parent=1 // pred_check
      _
    $region19: #{mlp_forward.1} parent=1 // pred_check_branch
      %44 = sbr.rel (0) target = $region21
    $region20: #{mlp_forward.1} parent=1 // pred_region
      _
    $region21: #{mlp_forward.1} parent=1 // pred_fallthru
      _
    // Predicated region
    $region22: #{mlp_forward.1} parent=1 // pred_check
      _
    $region23: #{mlp_forward.1} parent=1 // pred_check_branch
      %46 = sbr.rel (0) target = $region25
    $region24: #{mlp_forward.1} parent=1 // pred_region
      %s48 = ssub.s32 1024, 1024
      %49 = vsyncadd [#allocation6], %s48
      %s50 = sshll.u32 [#allocation7], 4
      %s51 = int_to_ptr.vmem [resolvable:$true] %s50
      %56 = dma.hbm_to_vmem [thread:$0]  %s5, 1024, %s51, [#allocation6], 64, 64, 4
    $region25: #{mlp_forward.1} parent=1 // pred_fallthru
      _
    // Predicated region
    $region26: #{mlp_forward.1} parent=1 // pred_check
      _
    $region27: #{mlp_forward.1} parent=1 // pred_check_branch
      %58 = sbr.rel (0) target = $region29
    $region28: #{mlp_forward.1} parent=1 // pred_region
      _
    $region29: #{mlp_forward.1} parent=1 // pred_fallthru
      _
    // Predicated region
    $region30: #{mlp_forward.1} parent=1 // pred_check
      _
    $region31: #{mlp_forward.1} parent=1 // pred_check_branch
      %60 = sbr.rel (0) target = $region33
    $region32: #{mlp_forward.1} parent=1 // pred_region
      %61 = dma.done [#allocation3], 1024
    $region33: #{mlp_forward.1} parent=1 // pred_fallthru
      _
    // Predicated region
    $region34: #{mlp_forward.1} parent=1 // pred_check
      _
    $region35: #{mlp_forward.1} parent=1 // pred_check_branch
      %63 = sbr.rel (0) target = $region37
    $region36: #{mlp_forward.1} parent=1 // pred_region
      %64 = dma.done [#allocation6], 1024
    $region37: #{mlp_forward.1} parent=1 // pred_fallthru
      _
    // Predicated region
    $region38: #{mlp_forward.1} parent=1 // pred_check
      _
    $region39: #{mlp_forward.1} parent=1 // pred_check_branch
      %66 = sbr.rel (0) target = $region41
    $region40: #{mlp_forward.1} parent=1 // pred_region
      %67 = dma.done [#allocation6], 1024
    $region41: #{mlp_forward.1} parent=1 // pred_fallthru
      _
    %v69 = vld [vmem:[%s0] sm:$0xff]
    %v70 = vld [vmem:[#allocation2] sm:$0xf]
    %v71 = vld [vmem:[#allocation2 + $0x4] sm:$0xf]
    %v72 = vld [vmem:[#allocation2 + $0x8] sm:$0xf]
    %v73 = vld [vmem:[#allocation2 + $0xc] sm:$0xf]
    %v74 = vld [vmem:[#allocation2 + $0x10] sm:$0xf]
    %v75 = vld [vmem:[#allocation2 + $0x14] sm:$0xf]
    %v76 = vld [vmem:[#allocation2 + $0x18] sm:$0xf]
    %v77 = vld [vmem:[#allocation2 + $0x1c] sm:$0xf]
    %v78 = vld [vmem:[#allocation2 + $0x20] sm:$0xf]
    %v79 = vld [vmem:[#allocation2 + $0x24] sm:$0xf]
    %v80 = vld [vmem:[#allocation2 + $0x28] sm:$0xf]
    %v81 = vld [vmem:[#allocation2 + $0x2c] sm:$0xf]
    %v82 = vld [vmem:[#allocation2 + $0x30] sm:$0xf]
    %v83 = vld [vmem:[#allocation2 + $0x34] sm:$0xf]
    %v84 = vld [vmem:[#allocation2 + $0x38] sm:$0xf]
    %v85 = vld [vmem:[#allocation2 + $0x3c] sm:$0xf]
    %v86 = vld [vmem:[%s2] sm:$0xff]
    %v87 = vpack.c.bf16 %v69, %v69
    %v88 = vlaneseq
    %v89 = vshrl.u32 %v88, 7
    %v90 = vsub.s32 0, %v89
    %v91 = vrot.slane %v86, %v90
    %v108 = vunpack.c.l.b16 %v70
    %v109 = vunpack.c.l.b16 %v71
    %v110 = vunpack.c.l.b16 %v72
    %v111 = vunpack.c.l.b16 %v73
    %v112 = vunpack.c.l.b16 %v74
    %v113 = vunpack.c.l.b16 %v75
    %v114 = vunpack.c.l.b16 %v76
    %v115 = vunpack.c.l.b16 %v77
    %v116 = vunpack.c.l.b16 %v78
    %v117 = vunpack.c.l.b16 %v79
    %v118 = vunpack.c.l.b16 %v80
    %v119 = vunpack.c.l.b16 %v81
    %v120 = vunpack.c.l.b16 %v82
    %v121 = vunpack.c.l.b16 %v83
    %v122 = vunpack.c.l.b16 %v84
    %v123 = vunpack.c.l.b16 %v85
    %v124 = vpack.c.b16 %v109, %v108
    %v125 = vpack.c.b16 %v111, %v110
    %v126 = vpack.c.b16 %v113, %v112
    %v127 = vpack.c.b16 %v115, %v114
    %v128 = vpack.c.b16 %v117, %v116
    %v129 = vpack.c.b16 %v119, %v118
    %v130 = vpack.c.b16 %v121, %v120
    %v131 = vpack.c.b16 %v123, %v122
    %140 = vmatprep.subr.bf16.mxu0 0
    %141 = vmatpush1.bf16.msra.mxu0 %v124
    %142 = vmatprep.subr.bf16.mxu0 0
    %143 = vmatpush1.bf16.msra.mxu0 %v125
    %144 = vmatprep.subr.bf16.mxu0 0
    %145 = vmatpush1.bf16.msra.mxu0 %v126
    %146 = vmatprep.subr.bf16.mxu0 0
    %147 = vmatpush1.bf16.msra.mxu0 %v127
    %148 = vmatprep.subr.bf16.mxu0 0
    %149 = vmatpush1.bf16.msra.mxu0 %v128
    %150 = vmatprep.subr.bf16.mxu0 0
    %151 = vmatpush1.bf16.msra.mxu0 %v129
    %152 = vmatprep.subr.bf16.mxu0 0
    %153 = vmatpush1.bf16.msra.mxu0 %v130
    %154 = vmatprep.subr.bf16.mxu0 0
    %155 = vmatpush1.bf16.msra.mxu0 %v131
    %156 = vmatprep.subr.bf16.mxu0 0
    %157 = vmatpush1.bf16.msra.mxu0 0
    %158 = vmatprep.subr.bf16.mxu0 0
    %159 = vmatpush1.bf16.msra.mxu0 0
    %160 = vmatprep.subr.bf16.mxu0 0
    %161 = vmatpush1.bf16.msra.mxu0 0
    %162 = vmatprep.subr.bf16.mxu0 0
    %163 = vmatpush1.bf16.msra.mxu0 0
    %164 = vmatprep.subr.bf16.mxu0 0
    %165 = vmatpush1.bf16.msra.mxu0 0
    %166 = vmatprep.subr.bf16.mxu0 0
    %167 = vmatpush1.bf16.msra.mxu0 0
    %168 = vmatprep.subr.bf16.mxu0 0
    %169 = vmatpush1.bf16.msra.mxu0 0
    %170 = vmatprep.subr.bf16.mxu0 0
    %171 = vmatpush1.bf16.msra.mxu0 0
    %172 = vmatprep.mubr.bf16.mxu0 0
    %173 = vmatmul.mubr.bf16.gmra.mrb[0].mxu0 %v87
    %v174 = vpop.f32.mrb[0].mxu0
    %v175 = vadd.f32 %v91, %v174
    %v176 = vpop.f32.mrb[0].mxu0
    %v177 = vpop.f32.mrb[0].mxu0
    %v178 = vpop.f32.mrb[0].mxu0
    %179 = vdwg.mxu0
    %vm180 = vcmp.gt.f32.partialorder %v175, 0.0
    %v181 = vmul.f32 %v175, 0.01
    %v182 = vsel %vm180, %v175, %v181
    %v183 = vld [vmem:[#allocation5] sm:$0xf]
    %v184 = vld [vmem:[#allocation5 + $0x4] sm:$0xf]
    %v185 = vld [vmem:[#allocation5 + $0x8] sm:$0xf]
    %v186 = vld [vmem:[#allocation5 + $0xc] sm:$0xf]
    %v187 = vld [vmem:[#allocation5 + $0x10] sm:$0xf]
    %v188 = vld [vmem:[#allocation5 + $0x14] sm:$0xf]
    %v189 = vld [vmem:[#allocation5 + $0x18] sm:$0xf]
    %v190 = vld [vmem:[#allocation5 + $0x1c] sm:$0xf]
    %v191 = vld [vmem:[#allocation5 + $0x20] sm:$0xf]
    %v192 = vld [vmem:[#allocation5 + $0x24] sm:$0xf]
    %v193 = vld [vmem:[#allocation5 + $0x28] sm:$0xf]
    %v194 = vld [vmem:[#allocation5 + $0x2c] sm:$0xf]
    %v195 = vld [vmem:[#allocation5 + $0x30] sm:$0xf]
    %v196 = vld [vmem:[#allocation5 + $0x34] sm:$0xf]
    %v197 = vld [vmem:[#allocation5 + $0x38] sm:$0xf]
    %v198 = vld [vmem:[#allocation5 + $0x3c] sm:$0xf]
    %v199 = vld [vmem:[%s4] sm:$0xff]
    %v200 = vpack.c.bf16 %v182, %v182
    %v201 = vlaneseq
    %v202 = vshrl.u32 %v201, 7
    %v203 = vsub.s32 0, %v202
    %v204 = vrot.slane %v199, %v203
    %v221 = vunpack.c.l.b16 %v183
    %v222 = vunpack.c.l.b16 %v184
    %v223 = vunpack.c.l.b16 %v185
    %v224 = vunpack.c.l.b16 %v186
    %v225 = vunpack.c.l.b16 %v187
    %v226 = vunpack.c.l.b16 %v188
    %v227 = vunpack.c.l.b16 %v189
    %v228 = vunpack.c.l.b16 %v190
    %v229 = vunpack.c.l.b16 %v191
    %v230 = vunpack.c.l.b16 %v192
    %v231 = vunpack.c.l.b16 %v193
    %v232 = vunpack.c.l.b16 %v194
    %v233 = vunpack.c.l.b16 %v195
    %v234 = vunpack.c.l.b16 %v196
    %v235 = vunpack.c.l.b16 %v197
    %v236 = vunpack.c.l.b16 %v198
    %v237 = vpack.c.b16 %v222, %v221
    %v238 = vpack.c.b16 %v224, %v223
    %v239 = vpack.c.b16 %v226, %v225
    %v240 = vpack.c.b16 %v228, %v227
    %v241 = vpack.c.b16 %v230, %v229
    %v242 = vpack.c.b16 %v232, %v231
    %v243 = vpack.c.b16 %v234, %v233
    %v244 = vpack.c.b16 %v236, %v235
    %253 = vmatprep.subr.bf16.mxu0 0
    %254 = vmatpush1.bf16.msra.mxu0 %v237
    %255 = vmatprep.subr.bf16.mxu0 0
    %256 = vmatpush1.bf16.msra.mxu0 %v238
    %257 = vmatprep.subr.bf16.mxu0 0
    %258 = vmatpush1.bf16.msra.mxu0 %v239
    %259 = vmatprep.subr.bf16.mxu0 0
    %260 = vmatpush1.bf16.msra.mxu0 %v240
    %261 = vmatprep.subr.bf16.mxu0 0
    %262 = vmatpush1.bf16.msra.mxu0 %v241
    %263 = vmatprep.subr.bf16.mxu0 0
    %264 = vmatpush1.bf16.msra.mxu0 %v242
    %265 = vmatprep.subr.bf16.mxu0 0
    %266 = vmatpush1.bf16.msra.mxu0 %v243
    %267 = vmatprep.subr.bf16.mxu0 0
    %268 = vmatpush1.bf16.msra.mxu0 %v244
    %269 = vmatprep.subr.bf16.mxu0 0
    %270 = vmatpush1.bf16.msra.mxu0 0
    %271 = vmatprep.subr.bf16.mxu0 0
    %272 = vmatpush1.bf16.msra.mxu0 0
    %273 = vmatprep.subr.bf16.mxu0 0
    %274 = vmatpush1.bf16.msra.mxu0 0
    %275 = vmatprep.subr.bf16.mxu0 0
    %276 = vmatpush1.bf16.msra.mxu0 0
    %277 = vmatprep.subr.bf16.mxu0 0
    %278 = vmatpush1.bf16.msra.mxu0 0
    %279 = vmatprep.subr.bf16.mxu0 0
    %280 = vmatpush1.bf16.msra.mxu0 0
    %281 = vmatprep.subr.bf16.mxu0 0
    %282 = vmatpush1.bf16.msra.mxu0 0
    %283 = vmatprep.subr.bf16.mxu0 0
    %284 = vmatpush1.bf16.msra.mxu0 0
    %285 = vmatprep.mubr.bf16.mxu0 0
    %286 = vmatmul.mubr.bf16.gmra.mrb[0].mxu0 %v200
    %v287 = vpop.f32.mrb[0].mxu0
    %v288 = vadd.f32 %v204, %v287
    %v289 = vpop.f32.mrb[0].mxu0
    %v290 = vpop.f32.mrb[0].mxu0
    %v291 = vpop.f32.mrb[0].mxu0
    %292 = vdwg.mxu0
    %vm293 = vcmp.gt.f32.partialorder %v288, 0.0
    %v294 = vmul.f32 %v288, 0.01
    %v295 = vsel %vm293, %v288, %v294
    %v296 = vld [vmem:[#allocation7] sm:$0xf]
    %v297 = vld [vmem:[#allocation7 + $0x4] sm:$0xf]
    %v298 = vld [vmem:[#allocation7 + $0x8] sm:$0xf]
    %v299 = vld [vmem:[#allocation7 + $0xc] sm:$0xf]
    %v300 = vld [vmem:[#allocation7 + $0x10] sm:$0xf]
    %v301 = vld [vmem:[#allocation7 + $0x14] sm:$0xf]
    %v302 = vld [vmem:[#allocation7 + $0x18] sm:$0xf]
    %v303 = vld [vmem:[#allocation7 + $0x1c] sm:$0xf]
    %v304 = vld [vmem:[#allocation7 + $0x20] sm:$0xf]
    %v305 = vld [vmem:[#allocation7 + $0x24] sm:$0xf]
    %v306 = vld [vmem:[#allocation7 + $0x28] sm:$0xf]
    %v307 = vld [vmem:[#allocation7 + $0x2c] sm:$0xf]
    %v308 = vld [vmem:[#allocation7 + $0x30] sm:$0xf]
    %v309 = vld [vmem:[#allocation7 + $0x34] sm:$0xf]
    %v310 = vld [vmem:[#allocation7 + $0x38] sm:$0xf]
    %v311 = vld [vmem:[#allocation7 + $0x3c] sm:$0xf]
    %v312 = vld [vmem:[%s6] sm:$0xff]
    %v313 = vpack.c.bf16 %v295, %v295
    %v314 = vlaneseq
    %v315 = vshrl.u32 %v314, 7
    %v316 = vsub.s32 0, %v315
    %v317 = vrot.slane %v312, %v316
    %v334 = vunpack.c.l.b16 %v296
    %v335 = vunpack.c.l.b16 %v297
    %v336 = vunpack.c.l.b16 %v298
    %v337 = vunpack.c.l.b16 %v299
    %v338 = vunpack.c.l.b16 %v300
    %v339 = vunpack.c.l.b16 %v301
    %v340 = vunpack.c.l.b16 %v302
    %v341 = vunpack.c.l.b16 %v303
    %v342 = vunpack.c.l.b16 %v304
    %v343 = vunpack.c.l.b16 %v305
    %v344 = vunpack.c.l.b16 %v306
    %v345 = vunpack.c.l.b16 %v307
    %v346 = vunpack.c.l.b16 %v308
    %v347 = vunpack.c.l.b16 %v309
    %v348 = vunpack.c.l.b16 %v310
    %v349 = vunpack.c.l.b16 %v311
    %v350 = vpack.c.b16 %v335, %v334
    %v351 = vpack.c.b16 %v337, %v336
    %v352 = vpack.c.b16 %v339, %v338
    %v353 = vpack.c.b16 %v341, %v340
    %v354 = vpack.c.b16 %v343, %v342
    %v355 = vpack.c.b16 %v345, %v344
    %v356 = vpack.c.b16 %v347, %v346
    %v357 = vpack.c.b16 %v349, %v348
    %366 = vmatprep.subr.bf16.mxu0 0
    %367 = vmatpush1.bf16.msra.mxu0 %v350
    %368 = vmatprep.subr.bf16.mxu0 0
    %369 = vmatpush1.bf16.msra.mxu0 %v351
    %370 = vmatprep.subr.bf16.mxu0 0
    %371 = vmatpush1.bf16.msra.mxu0 %v352
    %372 = vmatprep.subr.bf16.mxu0 0
    %373 = vmatpush1.bf16.msra.mxu0 %v353
    %374 = vmatprep.subr.bf16.mxu0 0
    %375 = vmatpush1.bf16.msra.mxu0 %v354
    %376 = vmatprep.subr.bf16.mxu0 0
    %377 = vmatpush1.bf16.msra.mxu0 %v355
    %378 = vmatprep.subr.bf16.mxu0 0
    %379 = vmatpush1.bf16.msra.mxu0 %v356
    %380 = vmatprep.subr.bf16.mxu0 0
    %381 = vmatpush1.bf16.msra.mxu0 %v357
    %382 = vmatprep.subr.bf16.mxu0 0
    %383 = vmatpush1.bf16.msra.mxu0 0
    %384 = vmatprep.subr.bf16.mxu0 0
    %385 = vmatpush1.bf16.msra.mxu0 0
    %386 = vmatprep.subr.bf16.mxu0 0
    %387 = vmatpush1.bf16.msra.mxu0 0
    %388 = vmatprep.subr.bf16.mxu0 0
    %389 = vmatpush1.bf16.msra.mxu0 0
    %390 = vmatprep.subr.bf16.mxu0 0
    %391 = vmatpush1.bf16.msra.mxu0 0
    %392 = vmatprep.subr.bf16.mxu0 0
    %393 = vmatpush1.bf16.msra.mxu0 0
    %394 = vmatprep.subr.bf16.mxu0 0
    %395 = vmatpush1.bf16.msra.mxu0 0
    %396 = vmatprep.subr.bf16.mxu0 0
    %397 = vmatpush1.bf16.msra.mxu0 0
    %398 = vmatprep.mubr.bf16.mxu0 0
    %399 = vmatmul.mubr.bf16.gmra.mrb[0].mxu0 %v313
    %v400 = vpop.f32.mrb[0].mxu0
    %v401 = vadd.f32 %v317, %v400
    %v402 = vpop.f32.mrb[0].mxu0
    %v403 = vpop.f32.mrb[0].mxu0
    %v404 = vpop.f32.mrb[0].mxu0
    %405 = vdwg.mxu0
    %vm406 = vcmp.gt.f32.partialorder %v401, 0.0
    %v407 = vmul.f32 %v401, 0.01
    %v408 = vsel %vm406, %v401, %v407
    %409 = vst [vmem:[#allocation8] sm:$0xff] %v408
    // Predicated region
    $region42: #{mlp_forward.1} parent=1 // pred_check
      _
    $region43: #{mlp_forward.1} parent=1 // pred_check_branch
      %411 = sbr.rel (0) target = $region45
    $region44: #{mlp_forward.1} parent=1 // pred_region
      %s413 = ssub.s32 128, 128
      %414 = vsyncadd [#allocation4], %s413
      %s416 = sshll.u32 [#allocation8], 4
      %s417 = int_to_ptr.vmem [resolvable:$true] %s416
      %419 = dma.vmem_to_hbm [thread:$0]  %s417, 128, %s7, [#allocation4]
    $region45: #{mlp_forward.1} parent=1 // pred_fallthru
      _
    // Predicated region
    $region46: #{mlp_forward.1} parent=1 // pred_check
      _
    $region47: #{mlp_forward.1} parent=1 // pred_check_branch
      %421 = sbr.rel (0) target = $region49
    $region48: #{mlp_forward.1} parent=1 // pred_region
      %422 = dma.done [#allocation4], 128
    $region49: #{mlp_forward.1} parent=1 // pred_fallthru
      _
    %423 = vsyncpa [#allocation3], 1
    %424 = vsyncpa [#allocation6], 1
    %425 = vsyncpa [#allocation4], 1

</llo_original>
